<compile_context>
chip_gen: v7x
topology: tpu7x:2x2x1
jax: 0.10.0
libtpu: 0.0.40
codegen_flags: <defaults>
</compile_context>

<pallas_src>
import functools
import math

import jax
import jax.numpy as jnp
from jax.experimental import pallas as pl
from jax.experimental.pallas import tpu as pltpu


def _round_up(x, m):
    return ((x + m - 1) // m) * m


def _softplus(v):
    # Numerically stable log(1 + exp(v)); matches torch.nn.Softplus (beta=1).
    return jnp.maximum(v, 0.0) + jnp.log1p(jnp.exp(-jnp.abs(v)))


# ----------------------------------------------------------------------------
# Kernel
# ----------------------------------------------------------------------------
def _cerberus_kernel(x_ref, w_ref, rffb_ref, hw_ref, hb_ref, out_ref, acc_ref,
                     *, clip_low, clip_high, bf16_cos):
    # x_ref:    (tm, K)   batch tile
    # w_ref:    (K, tn)   RFF weights, pre-transposed (canonical MXU layout)
    # rffb_ref: (1, tn)   RFF bias slice (f32)
    # hw_ref:   (tn, 8)   head weights (cols: median, lower, upper, pad) * sqrt(2/N)
    # hb_ref:   (1, 8)    head biases (padded)
    # out_ref:  (tm, 8)   fused output block (cols: lower, median, upper, pad)
    # acc_ref:  (tm, 8)   f32 head accumulator (persists across the N axis)
    j = pl.program_id(1)

    @pl.when(j == 0)
    def _init():
        acc_ref[...] = jnp.zeros_like(acc_ref)

    # (tm, K) @ (K, tn) on the MXU with f32 accumulation.
    proj = jnp.dot(x_ref[...], w_ref[...], preferred_element_type=jnp.float32)
    proj = proj + rffb_ref[...]
    if bf16_cos:
        # Optional: bf16 cos packs 2 elements per lane slot on v6e/v7x VALUs.
        proj = proj.astype(jnp.bfloat16)
    latent = jnp.cos(proj)                     # sqrt(2/N) is folded into hw.

    # Heads stay on the MXU: the cos over (tm, tn) (VPU/EUP) binds here, so the
    # few extra MXU pushes of this 8-wide GEMV are hidden filler.
    acc_ref[...] += jnp.dot(latent, hw_ref[...],
                            preferred_element_type=jnp.float32)

    @pl.when(j == pl.num_programs(1) - 1)
    def _finalize():
        heads = acc_ref[...] + hb_ref[...]     # (tm, 8) f32

        def _clip(v):
            # Static clip bounds: distinct (lo, hi) pairs re-trace (they are
            # module-constructor constants, so this happens once per model).
            if clip_low is not None:
                v = jnp.maximum(v, clip_low)
            if clip_high is not None:
                v = jnp.minimum(v, clip_high)
            return v

        median = _clip(heads[:, 0:1])
        lower = _clip(median - _softplus(heads[:, 1:2]))
        upper = _clip(median + _softplus(heads[:, 2:3]))
        out = jnp.concatenate(
            [lower, median, upper, jnp.zeros_like(heads[:, 3:8])], axis=1)
        out_ref[...] = out.astype(out_ref.dtype)


# ----------------------------------------------------------------------------
# VMEM planning
# ----------------------------------------------------------------------------
def _vmem_capacity_bytes():
    try:
        info = pltpu.get_tpu_info()
        for name in ("vmem_capacity_bytes", "vmem_size_bytes", "vmem_bytes"):
            v = getattr(info, name, None)
            if v:
                return int(v)
    except Exception:
        pass
    return 64 * 1024 * 1024   # conservative (v7x per-TC VMEM)


def _tile_bytes(rows, cols, dtype):
    """VMEM footprint of a (rows, cols) tile including (sublane, 128) padding."""
    itemsize = jnp.dtype(dtype).itemsize
    sublane = 8 * max(1, 4 // itemsize)        # 8 rows f32, 16 rows bf16
    return _round_up(max(rows, 1), sublane) * _round_up(max(cols, 1), 128) * itemsize


def _footprint_bytes(tm, tn, n_tiled, K, in_dtype, lat_dtype, single_buffer):
    w_buf = 1 if (single_buffer and not n_tiled) else 2
    total = w_buf * _tile_bytes(K, tn, in_dtype)           # RFF weights (K, tn)
    total += w_buf * _tile_bytes(1, tn, jnp.float32)        # RFF bias
    total += w_buf * _tile_bytes(tn, 8, lat_dtype)          # head weights
    total += 2 * _tile_bytes(1, 8, jnp.float32)             # head bias
    total += 2 * _tile_bytes(tm, K, in_dtype)               # x (double buffered)
    total += 2 * _tile_bytes(tm, 8, jnp.float32)            # fused output
    total += _tile_bytes(tm, 8, jnp.float32)                # accumulator scratch
    # In-kernel temporaries: proj (f32) + latent + compiler slack.
    total += _tile_bytes(tm, tn, jnp.float32)
    total += _tile_bytes(tm, tn, lat_dtype)
    total += _tile_bytes(tm, tn, jnp.float32)
    return total


def _pick_tiles(B, K, N, in_dtype, lat_dtype, row_align, budget, single_buffer):
    """Largest (tm, tn) that fits the VMEM budget; prefer full-N residency."""
    b_round = _round_up(max(B, 1), row_align)
    tm_cands = [b_round] + [t for t in (2048, 1024, 512, 256, 128, 64, 32, 16, 8)
                            if t % row_align == 0 and t < b_round]
    tn_cands = [(N, False)] + [(t, True)
                               for t in (4096, 2048, 1024, 512, 256, 128) if t < N]
    for tn, n_tiled in tn_cands:
        for tm in tm_cands:
            if _footprint_bytes(tm, tn, n_tiled, K, in_dtype, lat_dtype,
                                single_buffer) <= budget:
                return tm, tn, n_tiled
    # Last resort: smallest tiles (may still exceed the budget for huge K).
    return row_align, (N if N <= 128 else 128), N > 128


# ----------------------------------------------------------------------------
# Wrapper
# ----------------------------------------------------------------------------
def rff_cerberus(x, W, b, head_w, head_b, *, clip_low=None, clip_high=None,
                 compute_dtype=None, bf16_cos=False, tm=None, tn=None):
    """Fused RFFCerberus forward.

    x:      (B, K)   input
    W:      (N, K)   RFF weights (PyTorch layout)
    b:      (N,)     RFF bias
    head_w: (3, N)   rows = [median, lower, upper] nn.Linear weights
    head_b: (3,)     corresponding biases
    compute_dtype: optional MXU operand dtype (e.g. jnp.bfloat16; valid on
      v5e/v6e/v7x — halves x/W DMA bytes, results drift slightly from f32).
    bf16_cos: compute the cos / latent in bf16 (v6e/v7x VALU win, opt-in).
    Returns (lower, median, upper), each (B, 1).
    """
    B, K = x.shape
    N, K2 = W.shape
    assert K == K2, "W must be (latent_dim, input_dim)"
    assert head_w.shape == (3, N) and head_b.shape == (3,)

    out_dtype = x.dtype
    in_dtype = jnp.dtype(compute_dtype) if compute_dtype is not None else jnp.dtype(x.dtype)
    lat_dtype = jnp.bfloat16 if bf16_cos else jnp.float32

    # One-time (K, N) relayout in HBM -> both MXU contractions are canonical.
    x = x.astype(in_dtype)
    wt = jnp.asarray(W).T.astype(in_dtype)                        # (K, N)
    rffb = jnp.asarray(b).reshape(1, N).astype(jnp.float32)       # (1, N)
    scale = math.sqrt(2.0 / N)
    # Fold sqrt(2/N) into the (tiny) head weights instead of the (B, N) latent.
    hw = (scale * jnp.asarray(head_w).astype(jnp.float32)).T      # (N, 3)
    hw = jnp.pad(hw, ((0, 0), (0, 5))).astype(lat_dtype)          # (N, 8)
    hb = jnp.pad(jnp.asarray(head_b).astype(jnp.float32), (0, 5)).reshape(1, 8)

    itemsize = jnp.dtype(in_dtype).itemsize
    row_align = 16 if itemsize < 4 else 8

    vmem_cap = _vmem_capacity_bytes()
    budget = int(vmem_cap * 0.65)          # planning budget
    vmem_limit = int(vmem_cap * 0.80)      # explicit scoped-VMEM limit

    tm_arg, tn_arg = tm, tn
    auto_tm, auto_tn, _ = _pick_tiles(B, K, N, in_dtype, lat_dtype,
                                      row_align, budget, True)
    tm = _round_up(int(tm_arg), row_align) if tm_arg is not None else auto_tm
    tn = int(tn_arg) if tn_arg is not None else auto_tn
    tn = N if tn >= N else _round_up(tn, 128)
    n_tiled = tn < N

    b_round = _round_up(max(B, 1), row_align)
    if tm_arg is None and b_round > row_align and tm >= b_round:
        # >= 2 batch tiles lets the runtime shard the "parallel" axis across
        # both TensorCores on dual-TC parts (v7x); ~free on single-TC chips.
        tm = max(row_align, _round_up((b_round + 1) // 2, row_align))

    B_pad = _round_up(max(B, 1), tm)
    N_pad = _round_up(N, tn) if n_tiled else N

    if B_pad != B:
        x = jnp.pad(x, ((0, B_pad - B), (0, 0)))
    if N_pad != N:
        wt = jnp.pad(wt, ((0, 0), (0, N_pad - N)))
        rffb = jnp.pad(rffb, ((0, 0), (0, N_pad - N)))
        hw = jnp.pad(hw, ((0, N_pad - N), (0, 0)))

    grid = (B_pad // tm, N_pad // tn)
    kernel = functools.partial(_cerberus_kernel, clip_low=clip_low,
                               clip_high=clip_high, bf16_cos=bf16_cos)
    cost = pl.CostEstimate(
        flops=2 * B_pad * K * N_pad + 2 * B_pad * N_pad * 8,
        transcendentals=B_pad * N_pad + 4 * B_pad,
        bytes_accessed=(B_pad * K + K * N_pad) * itemsize
                       + (N_pad + N_pad * 8 + 8) * 4
                       + B_pad * 8 * jnp.dtype(out_dtype).itemsize)

    def _build(single_buffer):
        extra = dict(pipeline_mode=pl.Buffered(1)) if single_buffer else {}
        in_specs = [
            pl.BlockSpec((tm, K), lambda i, j: (i, 0)),               # x tile
            pl.BlockSpec((K, tn), lambda i, j: (0, j), **extra),      # W.T
            pl.BlockSpec((1, tn), lambda i, j: (0, j), **extra),      # RFF bias
            pl.BlockSpec((tn, 8), lambda i, j: (j, 0), **extra),      # head weights
            pl.BlockSpec((1, 8), lambda i, j: (0, 0), **extra),       # head biases
        ]
        return pl.pallas_call(
            kernel,
            out_shape=jax.ShapeDtypeStruct((B_pad, 8), out_dtype),
            grid_spec=pltpu.PrefetchScalarGridSpec(
                num_scalar_prefetch=0,
                grid=grid,
                in_specs=in_specs,
                out_specs=pl.BlockSpec((tm, 8), lambda i, j: (i, 0)),
                scratch_shapes=[pltpu.VMEM((tm, 8), jnp.float32)],
            ),
            compiler_params=pltpu.CompilerParams(
                dimension_semantics=("parallel", "arbitrary"),
                vmem_limit_bytes=vmem_limit,
            ),
            cost_estimate=cost,
        )

    args = (x, wt, rffb, hw, hb)
    if n_tiled:
        out = _build(False)(*args)
    else:
        try:
            # Grid-invariant weights -> single VMEM buffer (halves the resident
            # W footprint; matters most on v7x's 64 MiB VMEM).
            out = _build(True)(*args)
        except Exception:
            # Fallback if Buffered(1) pipeline mode is unavailable in this build.
            out = _build(False)(*args)

    lower = out[:B, 0:1]
    median = out[:B, 1:2]
    upper = out[:B, 2:3]
    return lower, median, upper


# ----------------------------------------------------------------------------
# Demo / self-test
# ----------------------------------------------------------------------------
def init_rff_params(key, input_dim, output_dim, gamma, df=5):
    """Deterministic re-implementation of RandomFourierFeatures.__init__."""
    kz, kv, kb = jax.random.split(key, 3)
    Z = jax.random.normal(kz, (output_dim, input_dim), dtype=jnp.float32)
    k_shape = df / 2.0
    theta = 2.0
    # torch Gamma(concentration=k, rate=theta); jax gamma is unit-rate -> divide.
    V = jax.random.gamma(kv, k_shape, (output_dim, input_dim),
                         dtype=jnp.float32) / theta
    W = math.sqrt(2.0 * gamma) * Z / jnp.sqrt(V / df)
    b = jax.random.uniform(kb, (output_dim,), dtype=jnp.float32) * 2.0 * math.pi
    return W, b


def _reference(x, W, b, head_w, head_b, clip_low, clip_high):
    scale = math.sqrt(2.0 / W.shape[0])
    latent = scale * jnp.cos(x @ W.T + b)
    heads = latent @ head_w.T + head_b
    lo = -jnp.inf if clip_low is None else clip_low
    hi = jnp.inf if clip_high is None else clip_high
    med = jnp.clip(heads[:, 0:1], lo, hi)
    low = jnp.clip(med - jax.nn.softplus(heads[:, 1:2]), lo, hi)
    up = jnp.clip(med + jax.nn.softplus(heads[:, 2:3]), lo, hi)
    return low, med, up


if __name__ == "__main__":
    # --- Test 1: default path (full-N VMEM-resident weights, single N step) ---
    key = jax.random.PRNGKey(0)
    kx, kp, kh, khb = jax.random.split(key, 4)
    batch, input_dim, latent_dim, gamma = 8, 32, 128, 1.0
    clip_low, clip_high = -1.0, 1.0

    x = jax.random.normal(kx, (batch, input_dim), dtype=jnp.float32)
    W, b = init_rff_params(kp, input_dim, latent_dim, gamma, df=5)
    head_w = 0.1 * jax.random.normal(kh, (3, latent_dim), dtype=jnp.float32)
    head_b = 0.1 * jax.random.normal(khb, (3,), dtype=jnp.float32)

    lower, median, upper = rff_cerberus(
        x, W, b, head_w, head_b, clip_low=clip_low, clip_high=clip_high)
    jax.block_until_ready((lower, median, upper))

    low_r, med_r, up_r = _reference(x, W, b, head_w, head_b, clip_low, clip_high)
    assert lower.shape == (batch, 1)
    assert median.shape == (batch, 1)
    assert upper.shape == (batch, 1)
    assert jnp.allclose(median, med_r, atol=1e-4, rtol=1e-4)
    assert jnp.allclose(lower, low_r, atol=1e-4, rtol=1e-4)
    assert jnp.allclose(upper, up_r, atol=1e-4, rtol=1e-4)

    # --- Test 2: forced N-tiling + batch/N padding (accumulator path) ---
    key2 = jax.random.PRNGKey(1)
    kx2, kp2, kh2, khb2 = jax.random.split(key2, 4)
    batch2, input_dim2, latent_dim2 = 45, 24, 320
    x2 = jax.random.normal(kx2, (batch2, input_dim2), dtype=jnp.float32)
    W2, b2 = init_rff_params(kp2, input_dim2, latent_dim2, 0.5, df=5)
    head_w2 = 0.1 * jax.random.normal(kh2, (3, latent_dim2), dtype=jnp.float32)
    head_b2 = 0.1 * jax.random.normal(khb2, (3,), dtype=jnp.float32)

    lo2, me2, up2 = rff_cerberus(x2, W2, b2, head_w2, head_b2, tm=16, tn=128)
    jax.block_until_ready((lo2, me2, up2))
    lo2_r, me2_r, up2_r = _reference(x2, W2, b2, head_w2, head_b2, None, None)
    assert lo2.shape == (batch2, 1)
    assert jnp.allclose(me2, me2_r, atol=1e-3, rtol=1e-3)
    assert jnp.allclose(lo2, lo2_r, atol=1e-3, rtol=1e-3)
    assert jnp.allclose(up2, up2_r, atol=1e-3, rtol=1e-3)

    print("KERNEL_OK")
</pallas_src>

<mosaic_0001>
module attributes {stable_mosaic.version = 11 : i64} {
  func.func @_cerberus_kernel(%arg0: i32, %arg1: i32, %arg2: memref<8x32xf32, #tpu.memory_space<vmem>>, %arg3: memref<32x128xf32, #tpu.memory_space<vmem>>, %arg4: memref<1x128xf32, #tpu.memory_space<vmem>>, %arg5: memref<128x8xf32, #tpu.memory_space<vmem>>, %arg6: memref<1x8xf32, #tpu.memory_space<vmem>>, %arg7: memref<8x8xf32, #tpu.memory_space<vmem>>, %arg8: memref<8x8xf32, #tpu.memory_space<vmem>>) attributes {dimension_semantics = [#tpu.dimension_semantics<parallel>, #tpu.dimension_semantics<arbitrary>], iteration_bounds = array<i64: 1, 1>, scalar_prefetch = 0 : i64, scratch_operands = 1 : i64, tpu.core_type = #tpu.core_type<tc>, window_params = [{transform_indices = @transform_0, window_bounds = array<i64: 8, 32>}, {pipeline_mode = #tpu.pipeline_mode<synchronous>, transform_indices = @transform_1, window_bounds = array<i64: 32, 128>}, {pipeline_mode = #tpu.pipeline_mode<synchronous>, transform_indices = @transform_2, window_bounds = array<i64: 1, 128>}, {pipeline_mode = #tpu.pipeline_mode<synchronous>, transform_indices = @transform_3, window_bounds = array<i64: 128, 8>}, {pipeline_mode = #tpu.pipeline_mode<synchronous>, transform_indices = @transform_4, window_bounds = array<i64: 1, 8>}, {transform_indices = @transform_5, window_bounds = array<i64: 8, 8>}]} {
    %c0_i32 = arith.constant 0 : i32
    %0 = arith.cmpi eq, %arg1, %c0_i32 : i32
    %1 = arith.extui %0 : i1 to i32
    %c0_i32_0 = arith.constant 0 : i32
    %2 = arith.cmpi ne, %1, %c0_i32_0 : i32
    scf.if %2 {
      %cst_15 = arith.constant 0.000000e+00 : f32
      %18 = vector.broadcast %cst_15 : f32 to vector<8x8xf32>
      %c0_16 = arith.constant 0 : index
      %c0_17 = arith.constant 0 : index
      %19 = vector.load %arg8[%c0_16, %c0_17] : memref<8x8xf32, #tpu.memory_space<vmem>>, vector<8x8xf32>
      tpu.vector_store %arg8[%c0_16, %c0_17], %18 {strides = array<i32>} : memref<8x8xf32, #tpu.memory_space<vmem>>, vector<8x8xf32>,
    } else {
    }
    %c0 = arith.constant 0 : index
    %c0_1 = arith.constant 0 : index
    %3 = vector.load %arg2[%c0, %c0_1] : memref<8x32xf32, #tpu.memory_space<vmem>>, vector<8x32xf32>
    %c0_2 = arith.constant 0 : index
    %c0_3 = arith.constant 0 : index
    %4 = vector.load %arg3[%c0_2, %c0_3] : memref<32x128xf32, #tpu.memory_space<vmem>>, vector<32x128xf32>
    %cst = arith.constant dense<0.000000e+00> : vector<8x128xf32>
    %5 = tpu.matmul %3, %4, %cst {dimension_numbers = #tpu.dot_dimension_numbers<[1], [0], [0], [1], [0, 0, 1, 1], [], []>} : vector<8x32xf32>, vector<32x128xf32>, vector<8x128xf32> -> vector<8x128xf32>
    %c0_4 = arith.constant 0 : index
    %c0_5 = arith.constant 0 : index
    %6 = vector.load %arg4[%c0_4, %c0_5] : memref<1x128xf32, #tpu.memory_space<vmem>>, vector<1x128xf32>
    %7 = vector.broadcast %6 : vector<1x128xf32> to vector<8x128xf32>
    %8 = arith.addf %5, %7 : vector<8x128xf32>
    %9 = math.cos %8 : vector<8x128xf32>
    %c0_6 = arith.constant 0 : index
    %c0_7 = arith.constant 0 : index
    %10 = vector.load %arg8[%c0_6, %c0_7] : memref<8x8xf32, #tpu.memory_space<vmem>>, vector<8x8xf32>
    %c0_8 = arith.constant 0 : index
    %c0_9 = arith.constant 0 : index
    %11 = vector.load %arg5[%c0_8, %c0_9] : memref<128x8xf32, #tpu.memory_space<vmem>>, vector<128x8xf32>
    %cst_10 = arith.constant dense<0.000000e+00> : vector<8x8xf32>
    %12 = tpu.matmul %9, %11, %cst_10 {dimension_numbers = #tpu.dot_dimension_numbers<[1], [0], [0], [1], [0, 0, 1, 1], [], []>} : vector<8x128xf32>, vector<128x8xf32>, vector<8x8xf32> -> vector<8x8xf32>
    %13 = arith.addf %10, %12 : vector<8x8xf32>
    %c0_11 = arith.constant 0 : index
    %c0_12 = arith.constant 0 : index
    %14 = vector.load %arg8[%c0_11, %c0_12] : memref<8x8xf32, #tpu.memory_space<vmem>>, vector<8x8xf32>
    tpu.vector_store %arg8[%c0_11, %c0_12], %13 {strides = array<i32>} : memref<8x8xf32, #tpu.memory_space<vmem>>, vector<8x8xf32>,
    %c0_i32_13 = arith.constant 0 : i32
    %15 = arith.cmpi eq, %arg1, %c0_i32_13 : i32
    %16 = arith.extui %15 : i1 to i32
    %c0_i32_14 = arith.constant 0 : i32
    %17 = arith.cmpi ne, %16, %c0_i32_14 : i32
    scf.if %17 {
      %c0_15 = arith.constant 0 : index
      %c0_16 = arith.constant 0 : index
      %18 = vector.load %arg8[%c0_15, %c0_16] : memref<8x8xf32, #tpu.memory_space<vmem>>, vector<8x8xf32>
      %c0_17 = arith.constant 0 : index
      %c0_18 = arith.constant 0 : index
      %19 = vector.load %arg6[%c0_17, %c0_18] : memref<1x8xf32, #tpu.memory_space<vmem>>, vector<1x8xf32>
      %20 = vector.broadcast %19 : vector<1x8xf32> to vector<8x8xf32>
      %21 = arith.addf %18, %20 : vector<8x8xf32>
      %22 = vector.extract_strided_slice %21 {offsets = [0, 0], sizes = [8, 1], strides = [1, 1]} : vector<8x8xf32> to vector<8x1xf32>
      %cst_19 = arith.constant -1.000000e+00 : f32
      %23 = vector.broadcast %cst_19 : f32 to vector<8x1xf32>
      %24 = arith.maximumf %22, %23 : vector<8x1xf32>
      %cst_20 = arith.constant 1.000000e+00 : f32
      %25 = vector.broadcast %cst_20 : f32 to vector<8x1xf32>
      %26 = arith.minimumf %24, %25 : vector<8x1xf32>
      %27 = vector.extract_strided_slice %21 {offsets = [0, 1], sizes = [8, 1], strides = [1, 1]} : vector<8x8xf32> to vector<8x1xf32>
      %cst_21 = arith.constant 0.000000e+00 : f32
      %28 = vector.broadcast %cst_21 : f32 to vector<8x1xf32>
      %29 = arith.maximumf %27, %28 : vector<8x1xf32>
      %30 = math.absf %27 : vector<8x1xf32>
      %cst_22 = arith.constant 0.000000e+00 : f32
      %31 = vector.broadcast %cst_22 : f32 to vector<8x1xf32>
      %32 = arith.subf %31, %30 : vector<8x1xf32>
      %33 = math.exp %32 : vector<8x1xf32>
      %34 = math.log1p %33 : vector<8x1xf32>
      %35 = arith.addf %29, %34 : vector<8x1xf32>
      %36 = arith.subf %26, %35 : vector<8x1xf32>
      %cst_23 = arith.constant -1.000000e+00 : f32
      %37 = vector.broadcast %cst_23 : f32 to vector<8x1xf32>
      %38 = arith.maximumf %36, %37 : vector<8x1xf32>
      %cst_24 = arith.constant 1.000000e+00 : f32
      %39 = vector.broadcast %cst_24 : f32 to vector<8x1xf32>
      %40 = arith.minimumf %38, %39 : vector<8x1xf32>
      %41 = vector.extract_strided_slice %21 {offsets = [0, 2], sizes = [8, 1], strides = [1, 1]} : vector<8x8xf32> to vector<8x1xf32>
      %cst_25 = arith.constant 0.000000e+00 : f32
      %42 = vector.broadcast %cst_25 : f32 to vector<8x1xf32>
      %43 = arith.maximumf %41, %42 : vector<8x1xf32>
      %44 = math.absf %41 : vector<8x1xf32>
      %cst_26 = arith.constant 0.000000e+00 : f32
      %45 = vector.broadcast %cst_26 : f32 to vector<8x1xf32>
      %46 = arith.subf %45, %44 : vector<8x1xf32>
      %47 = math.exp %46 : vector<8x1xf32>
      %48 = math.log1p %47 : vector<8x1xf32>
      %49 = arith.addf %43, %48 : vector<8x1xf32>
      %50 = arith.addf %26, %49 : vector<8x1xf32>
      %cst_27 = arith.constant -1.000000e+00 : f32
      %51 = vector.broadcast %cst_27 : f32 to vector<8x1xf32>
      %52 = arith.maximumf %50, %51 : vector<8x1xf32>
      %cst_28 = arith.constant 1.000000e+00 : f32
      %53 = vector.broadcast %cst_28 : f32 to vector<8x1xf32>
      %54 = arith.minimumf %52, %53 : vector<8x1xf32>
      %cst_29 = arith.constant 0.000000e+00 : f32
      %55 = vector.broadcast %cst_29 : f32 to vector<8x5xf32>
      %56 = tpu.concatenate %40, %26, %54, %55 in 1 : vector<8x1xf32>, vector<8x1xf32>, vector<8x1xf32>, vector<8x5xf32> -> vector<8x8xf32>
      %c0_30 = arith.constant 0 : index
      %c0_31 = arith.constant 0 : index
      %57 = vector.load %arg7[%c0_30, %c0_31] : memref<8x8xf32, #tpu.memory_space<vmem>>, vector<8x8xf32>
      tpu.vector_store %arg7[%c0_30, %c0_31], %56 {strides = array<i32>} : memref<8x8xf32, #tpu.memory_space<vmem>>, vector<8x8xf32>,
    } else {
    }
    return
  }
  func.func @transform_0(%arg0: i32, %arg1: i32) -> (i32, i32) {
    %c0_i32 = arith.constant 0 : i32
    %c0_i32_0 = arith.constant 0 : i32
    return %arg0, %c0_i32 : i32, i32
  }
  func.func @transform_1(%arg0: i32, %arg1: i32) -> (i32, i32) {
    %c0_i32 = arith.constant 0 : i32
    %c0_i32_0 = arith.constant 0 : i32
    return %c0_i32, %arg1 : i32, i32
  }
  func.func @transform_2(%arg0: i32, %arg1: i32) -> (i32, i32) {
    %c0_i32 = arith.constant 0 : i32
    %c0_i32_0 = arith.constant 0 : i32
    return %c0_i32, %arg1 : i32, i32
  }
  func.func @transform_3(%arg0: i32, %arg1: i32) -> (i32, i32) {
    %c0_i32 = arith.constant 0 : i32
    %c0_i32_0 = arith.constant 0 : i32
    return %arg1, %c0_i32 : i32, i32
  }
  func.func @transform_4(%arg0: i32, %arg1: i32) -> (i32, i32) {
    %c0_i32 = arith.constant 0 : i32
    %c0_i32_0 = arith.constant 0 : i32
    %c0_i32_1 = arith.constant 0 : i32
    return %c0_i32, %c0_i32_0 : i32, i32
  }
  func.func @transform_5(%arg0: i32, %arg1: i32) -> (i32, i32) {
    %c0_i32 = arith.constant 0 : i32
    %c0_i32_0 = arith.constant 0 : i32
    return %arg0, %c0_i32 : i32, i32
  }
}

module attributes {stable_mosaic.version = 11 : i64} {
  func.func @_cerberus_kernel(%arg0: i32, %arg1: i32, %arg2: memref<8x32xf32, #tpu.memory_space<vmem>>, %arg3: memref<32x128xf32, #tpu.memory_space<vmem>>, %arg4: memref<1x128xf32, #tpu.memory_space<vmem>>, %arg5: memref<128x8xf32, #tpu.memory_space<vmem>>, %arg6: memref<1x8xf32, #tpu.memory_space<vmem>>, %arg7: memref<8x8xf32, #tpu.memory_space<vmem>>, %arg8: memref<8x8xf32, #tpu.memory_space<vmem>>) attributes {dimension_semantics = [#tpu.dimension_semantics<parallel>, #tpu.dimension_semantics<arbitrary>], iteration_bounds = array<i64: 1, 1>, scalar_prefetch = 0 : i64, scratch_operands = 1 : i64, tpu.core_type = #tpu.core_type<tc>, window_params = [{transform_indices = @transform_0, window_bounds = array<i64: 8, 32>}, {transform_indices = @transform_1, window_bounds = array<i64: 32, 128>}, {transform_indices = @transform_2, window_bounds = array<i64: 1, 128>}, {transform_indices = @transform_3, window_bounds = array<i64: 128, 8>}, {pipeline_mode = #tpu.pipeline_mode<synchronous>, transform_indices = @transform_4, window_bounds = array<i64: 1, 8>}, {transform_indices = @transform_5, window_bounds = array<i64: 8, 8>}]} {
    %c0_i32 = arith.constant 0 : i32
    %0 = arith.cmpi eq, %arg1, %c0_i32 : i32
    %1 = arith.extui %0 : i1 to i32
    %c0_i32_0 = arith.constant 0 : i32
    %2 = arith.cmpi ne, %1, %c0_i32_0 : i32
    scf.if %2 {
      %cst_15 = arith.constant 0.000000e+00 : f32
      %18 = vector.broadcast %cst_15 : f32 to vector<8x8xf32>
      %c0_16 = arith.constant 0 : index
      %c0_17 = arith.constant 0 : index
      %19 = vector.load %arg8[%c0_16, %c0_17] : memref<8x8xf32, #tpu.memory_space<vmem>>, vector<8x8xf32>
      tpu.vector_store %arg8[%c0_16, %c0_17], %18 {strides = array<i32>} : memref<8x8xf32, #tpu.memory_space<vmem>>, vector<8x8xf32>,
    } else {
    }
    %c0 = arith.constant 0 : index
    %c0_1 = arith.constant 0 : index
    %3 = vector.load %arg2[%c0, %c0_1] : memref<8x32xf32, #tpu.memory_space<vmem>>, vector<8x32xf32>
    %c0_2 = arith.constant 0 : index
    %c0_3 = arith.constant 0 : index
    %4 = vector.load %arg3[%c0_2, %c0_3] : memref<32x128xf32, #tpu.memory_space<vmem>>, vector<32x128xf32>
    %cst = arith.constant dense<0.000000e+00> : vector<8x128xf32>
    %5 = tpu.matmul %3, %4, %cst {dimension_numbers = #tpu.dot_dimension_numbers<[1], [0], [0], [1], [0, 0, 1, 1], [], []>} : vector<8x32xf32>, vector<32x128xf32>, vector<8x128xf32> -> vector<8x128xf32>
    %c0_4 = arith.constant 0 : index
    %c0_5 = arith.constant 0 : index
    %6 = vector.load %arg4[%c0_4, %c0_5] : memref<1x128xf32, #tpu.memory_space<vmem>>, vector<1x128xf32>
    %7 = vector.broadcast %6 : vector<1x128xf32> to vector<8x128xf32>
    %8 = arith.addf %5, %7 : vector<8x128xf32>
    %9 = math.cos %8 : vector<8x128xf32>
    %c0_6 = arith.constant 0 : index
    %c0_7 = arith.constant 0 : index
    %10 = vector.load %arg8[%c0_6, %c0_7] : memref<8x8xf32, #tpu.memory_space<vmem>>, vector<8x8xf32>
    %c0_8 = arith.constant 0 : index
    %c0_9 = arith.constant 0 : index
    %11 = vector.load %arg5[%c0_8, %c0_9] : memref<128x8xf32, #tpu.memory_space<vmem>>, vector<128x8xf32>
    %cst_10 = arith.constant dense<0.000000e+00> : vector<8x8xf32>
    %12 = tpu.matmul %9, %11, %cst_10 {dimension_numbers = #tpu.dot_dimension_numbers<[1], [0], [0], [1], [0, 0, 1, 1], [], []>} : vector<8x128xf32>, vector<128x8xf32>, vector<8x8xf32> -> vector<8x8xf32>
    %13 = arith.addf %10, %12 : vector<8x8xf32>
    %c0_11 = arith.constant 0 : index
    %c0_12 = arith.constant 0 : index
    %14 = vector.load %arg8[%c0_11, %c0_12] : memref<8x8xf32, #tpu.memory_space<vmem>>, vector<8x8xf32>
    tpu.vector_store %arg8[%c0_11, %c0_12], %13 {strides = array<i32>} : memref<8x8xf32, #tpu.memory_space<vmem>>, vector<8x8xf32>,
    %c0_i32_13 = arith.constant 0 : i32
    %15 = arith.cmpi eq, %arg1, %c0_i32_13 : i32
    %16 = arith.extui %15 : i1 to i32
    %c0_i32_14 = arith.constant 0 : i32
    %17 = arith.cmpi ne, %16, %c0_i32_14 : i32
    scf.if %17 {
      %c0_15 = arith.constant 0 : index
      %c0_16 = arith.constant 0 : index
      %18 = vector.load %arg8[%c0_15, %c0_16] : memref<8x8xf32, #tpu.memory_space<vmem>>, vector<8x8xf32>
      %c0_17 = arith.constant 0 : index
      %c0_18 = arith.constant 0 : index
      %19 = vector.load %arg6[%c0_17, %c0_18] : memref<1x8xf32, #tpu.memory_space<vmem>>, vector<1x8xf32>
      %20 = vector.broadcast %19 : vector<1x8xf32> to vector<8x8xf32>
      %21 = arith.addf %18, %20 : vector<8x8xf32>
      %22 = vector.extract_strided_slice %21 {offsets = [0, 0], sizes = [8, 1], strides = [1, 1]} : vector<8x8xf32> to vector<8x1xf32>
      %cst_19 = arith.constant -1.000000e+00 : f32
      %23 = vector.broadcast %cst_19 : f32 to vector<8x1xf32>
      %24 = arith.maximumf %22, %23 : vector<8x1xf32>
      %cst_20 = arith.constant 1.000000e+00 : f32
      %25 = vector.broadcast %cst_20 : f32 to vector<8x1xf32>
      %26 = arith.minimumf %24, %25 : vector<8x1xf32>
      %27 = vector.extract_strided_slice %21 {offsets = [0, 1], sizes = [8, 1], strides = [1, 1]} : vector<8x8xf32> to vector<8x1xf32>
      %cst_21 = arith.constant 0.000000e+00 : f32
      %28 = vector.broadcast %cst_21 : f32 to vector<8x1xf32>
      %29 = arith.maximumf %27, %28 : vector<8x1xf32>
      %30 = math.absf %27 : vector<8x1xf32>
      %cst_22 = arith.constant 0.000000e+00 : f32
      %31 = vector.broadcast %cst_22 : f32 to vector<8x1xf32>
      %32 = arith.subf %31, %30 : vector<8x1xf32>
      %33 = math.exp %32 : vector<8x1xf32>
      %34 = math.log1p %33 : vector<8x1xf32>
      %35 = arith.addf %29, %34 : vector<8x1xf32>
      %36 = arith.subf %26, %35 : vector<8x1xf32>
      %cst_23 = arith.constant -1.000000e+00 : f32
      %37 = vector.broadcast %cst_23 : f32 to vector<8x1xf32>
      %38 = arith.maximumf %36, %37 : vector<8x1xf32>
      %cst_24 = arith.constant 1.000000e+00 : f32
      %39 = vector.broadcast %cst_24 : f32 to vector<8x1xf32>
      %40 = arith.minimumf %38, %39 : vector<8x1xf32>
      %41 = vector.extract_strided_slice %21 {offsets = [0, 2], sizes = [8, 1], strides = [1, 1]} : vector<8x8xf32> to vector<8x1xf32>
      %cst_25 = arith.constant 0.000000e+00 : f32
      %42 = vector.broadcast %cst_25 : f32 to vector<8x1xf32>
      %43 = arith.maximumf %41, %42 : vector<8x1xf32>
      %44 = math.absf %41 : vector<8x1xf32>
      %cst_26 = arith.constant 0.000000e+00 : f32
      %45 = vector.broadcast %cst_26 : f32 to vector<8x1xf32>
      %46 = arith.subf %45, %44 : vector<8x1xf32>
      %47 = math.exp %46 : vector<8x1xf32>
      %48 = math.log1p %47 : vector<8x1xf32>
      %49 = arith.addf %43, %48 : vector<8x1xf32>
      %50 = arith.addf %26, %49 : vector<8x1xf32>
      %cst_27 = arith.constant -1.000000e+00 : f32
      %51 = vector.broadcast %cst_27 : f32 to vector<8x1xf32>
      %52 = arith.maximumf %50, %51 : vector<8x1xf32>
      %cst_28 = arith.constant 1.000000e+00 : f32
      %53 = vector.broadcast %cst_28 : f32 to vector<8x1xf32>
      %54 = arith.minimumf %52, %53 : vector<8x1xf32>
      %cst_29 = arith.constant 0.000000e+00 : f32
      %55 = vector.broadcast %cst_29 : f32 to vector<8x5xf32>
      %56 = tpu.concatenate %40, %26, %54, %55 in 1 : vector<8x1xf32>, vector<8x1xf32>, vector<8x1xf32>, vector<8x5xf32> -> vector<8x8xf32>
      %c0_30 = arith.constant 0 : index
      %c0_31 = arith.constant 0 : index
      %57 = vector.load %arg7[%c0_30, %c0_31] : memref<8x8xf32, #tpu.memory_space<vmem>>, vector<8x8xf32>
      tpu.vector_store %arg7[%c0_30, %c0_31], %56 {strides = array<i32>} : memref<8x8xf32, #tpu.memory_space<vmem>>, vector<8x8xf32>,
    } else {
    }
    return
  }
  func.func @transform_0(%arg0: i32, %arg1: i32) -> (i32, i32) {
    %c0_i32 = arith.constant 0 : i32
    %c0_i32_0 = arith.constant 0 : i32
    return %arg0, %c0_i32 : i32, i32
  }
  func.func @transform_1(%arg0: i32, %arg1: i32) -> (i32, i32) {
    %c0_i32 = arith.constant 0 : i32
    %c0_i32_0 = arith.constant 0 : i32
    return %c0_i32, %arg1 : i32, i32
  }
  func.func @transform_2(%arg0: i32, %arg1: i32) -> (i32, i32) {
    %c0_i32 = arith.constant 0 : i32
    %c0_i32_0 = arith.constant 0 : i32
    return %c0_i32, %arg1 : i32, i32
  }
  func.func @transform_3(%arg0: i32, %arg1: i32) -> (i32, i32) {
    %c0_i32 = arith.constant 0 : i32
    %c0_i32_0 = arith.constant 0 : i32
    return %arg1, %c0_i32 : i32, i32
  }
  func.func @transform_4(%arg0: i32, %arg1: i32) -> (i32, i32) {
    %c0_i32 = arith.constant 0 : i32
    %c0_i32_0 = arith.constant 0 : i32
    %c0_i32_1 = arith.constant 0 : i32
    return %c0_i32, %c0_i32_0 : i32, i32
  }
  func.func @transform_5(%arg0: i32, %arg1: i32) -> (i32, i32) {
    %c0_i32 = arith.constant 0 : i32
    %c0_i32_0 = arith.constant 0 : i32
    return %arg0, %c0_i32 : i32, i32
  }
}

</mosaic_0001>

<llo_original>
// kernel: tpu_custom_call.1
$region0: #{tpu_custom_call.1}
  #allocation0 [shape = 'u32[]', space=smem, size = 0x4, offset = 0x4, fixed_abs, tag = 'smem constant byte address 0x4 - core index']
  #allocation1 [shape = 'u32[144,128]{1,0:T(1,128)}', space=vmem, size = 0x12000, scoped, tag = 'internal scratch']
  #allocation2 [shape = 'f32[8,8]{1,0:T(8,128)}', space=vmem, size = 0x1000, scoped, tag = 'scratch operand']
  %s0 = inlined_call_operand.vmem [shape: f32[8,32], index: 0, kind: input, shape index: {}]
  %s1 = inlined_call_operand.vmem [shape: f32[32,128], index: 1, kind: input, shape index: {}]
  %s2 = inlined_call_operand.vmem [shape: f32[1,128], index: 2, kind: input, shape index: {}]
  %s3 = inlined_call_operand.vmem [shape: f32[128,8], index: 3, kind: input, shape index: {}]
  %s4 = inlined_call_operand.vmem [shape: f32[1,8], index: 4, kind: input, shape index: {}]
  %s5 = inlined_call_operand.hbm [shape: f32[8,8], index: 5, kind: output, shape index: {}]
  %s6 = sld [smem:[#allocation0]]
  $region38: #{tpu_custom_call.1} parent=0
    _
  %s8 = ssub.s32 1, %s6
  %s9 = scalar_select 0, %s8, %s6
  $region1: #{tpu_custom_call.1} parent=0
    #allocation3 [shape = 'u8[4096]{0}', space=vmem, size = 0x1000, scoped, tag = 'output window, operand 0, single buffered']
    #allocation4 [shape = 's32[1]{0}', space=sflag, size = 0x4, scoped, tag = 'scoped memory for tpu_custom_call.1']
    %10 = vsyncpa [#allocation4], 0
    // Predicated region
    $region2: #{tpu_custom_call.1} parent=1 // pred_check
      _
    $region3: #{tpu_custom_call.1} parent=1 // pred_check_branch
      %12 = sbr.rel (0) target = $region5
    $region4: #{tpu_custom_call.1} parent=1 // pred_region
      _
    $region5: #{tpu_custom_call.1} parent=1 // pred_fallthru
      _
    // Predicated region
    $region6: #{tpu_custom_call.1} parent=1 // pred_check
      _
    $region7: #{tpu_custom_call.1} parent=1 // pred_check_branch
      %14 = sbr.rel (0) target = $region9
    $region8: #{tpu_custom_call.1} parent=1 // pred_region
      _
    $region9: #{tpu_custom_call.1} parent=1 // pred_fallthru
      _
    // Predicated region
    $region10: #{tpu_custom_call.1} parent=1 // pred_check
      _
    $region11: #{tpu_custom_call.1} parent=1 // pred_check_branch
      %16 = sbr.rel (0) target = $region13
    $region12: #{tpu_custom_call.1} parent=1 // pred_region
      _
    $region13: #{tpu_custom_call.1} parent=1 // pred_fallthru
      _
    // Predicated region
    $region14: #{tpu_custom_call.1} parent=1 // pred_check
      _
    $region15: #{tpu_custom_call.1} parent=1 // pred_check_branch
      %18 = sbr.rel (0) target = $region17
    $region16: #{tpu_custom_call.1} parent=1 // pred_region
      _
    $region17: #{tpu_custom_call.1} parent=1 // pred_fallthru
      _
    // Predicated region
    $region18: #{tpu_custom_call.1} parent=1 // pred_check
      _
    $region19: #{tpu_custom_call.1} parent=1 // pred_check_branch
      %20 = sbr.rel (0) target = $region21
    $region20: #{tpu_custom_call.1} parent=1 // pred_region
      _
    $region21: #{tpu_custom_call.1} parent=1 // pred_fallthru
      _
    %p21 = scmp.eq.s32.totalorder 0, 0
    // Predicated region
    $region22: #{tpu_custom_call.1} parent=1 // pred_check
      %p22 = pneg %p21
    $region23: #{tpu_custom_call.1} parent=1 // pred_check_branch
      %24 = sbr.rel (%p22) target = $region25
    $region24: #{tpu_custom_call.1} parent=1 // pred_region
      %vm25 = vcmask 64512
      %26 = vst.msk [vmem:[#allocation2] sm:$0xff] %vm25, 0.0
    $region25: #{tpu_custom_call.1} parent=1 // pred_fallthru
      _
    %v27 = vld [vmem:[%s0] sm:$0xff]
    %v28 = vld [vmem:[%s1] sm:$0xff]
    %v29 = vld [vmem:[%s1 + $0x8] sm:$0xff]
    %v30 = vld [vmem:[%s1 + $0x10] sm:$0xff]
    %v31 = vld [vmem:[%s1 + $0x18] sm:$0xff]
    %v32 = vld [vmem:[%s2] sm:$0x1]
    %v34 = vlaneseq
    %v35 = vshrl.u32 %v34, 7
    %v36 = vsub.s32 0, %v35
    %v37 = vrot.slane %v32, %v36
    %vm39 = vcmask 261120
    %v41 = vsel %vm39, %v27, 0
    %43 = vmatprep.subr.mxu0 0.0
    %44 = vmatpush1.msra.mxu0 %v28
    %45 = vmatprep.subr.mxu0 0.0
    %46 = vmatpush1.msra.mxu0 %v29
    %47 = vmatprep.subr.mxu0 0.0
    %48 = vmatpush1.msra.mxu0 %v30
    %49 = vmatprep.subr.mxu0 0.0
    %50 = vmatpush1.msra.mxu0 %v31
    %51 = vmatprep.subr.mxu0 0.0
    %52 = vmatpush1.msra.mxu0 0.0
    %53 = vmatprep.subr.mxu0 0.0
    %54 = vmatpush1.msra.mxu0 0.0
    %55 = vmatprep.subr.mxu0 0.0
    %56 = vmatpush1.msra.mxu0 0.0
    %57 = vmatprep.subr.mxu0 0.0
    %58 = vmatpush1.msra.mxu0 0.0
    %59 = vmatprep.subr.mxu0 0.0
    %60 = vmatpush1.msra.mxu0 0.0
    %61 = vmatprep.subr.mxu0 0.0
    %62 = vmatpush1.msra.mxu0 0.0
    %63 = vmatprep.subr.mxu0 0.0
    %64 = vmatpush1.msra.mxu0 0.0
    %65 = vmatprep.subr.mxu0 0.0
    %66 = vmatpush1.msra.mxu0 0.0
    %67 = vmatprep.subr.mxu0 0.0
    %68 = vmatpush1.msra.mxu0 0.0
    %69 = vmatprep.subr.mxu0 0.0
    %70 = vmatpush1.msra.mxu0 0.0
    %71 = vmatprep.subr.mxu0 0.0
    %72 = vmatpush1.msra.mxu0 0.0
    %73 = vmatprep.subr.mxu0 0.0
    %74 = vmatpush1.msra.mxu0 0.0
    %75 = vmatprep.subr.mxu0 0.0
    %76 = vmatpush1.msra.mxu0 0.0
    %77 = vmatprep.subr.mxu0 0.0
    %78 = vmatpush1.msra.mxu0 0.0
    %79 = vmatprep.subr.mxu0 0.0
    %80 = vmatpush1.msra.mxu0 0.0
    %81 = vmatprep.subr.mxu0 0.0
    %82 = vmatpush1.msra.mxu0 0.0
    %83 = vmatprep.subr.mxu0 0.0
    %84 = vmatpush1.msra.mxu0 0.0
    %85 = vmatprep.subr.mxu0 0.0
    %86 = vmatpush1.msra.mxu0 0.0
    %87 = vmatprep.subr.mxu0 0.0
    %88 = vmatpush1.msra.mxu0 0.0
    %89 = vmatprep.subr.mxu0 0.0
    %90 = vmatpush1.msra.mxu0 0.0
    %91 = vmatprep.subr.mxu0 0.0
    %92 = vmatpush1.msra.mxu0 0.0
    %93 = vmatprep.subr.mxu0 0.0
    %94 = vmatpush1.msra.mxu0 0.0
    %95 = vmatprep.subr.mxu0 0.0
    %96 = vmatpush1.msra.mxu0 0.0
    %97 = vmatprep.subr.mxu0 0.0
    %98 = vmatpush1.msra.mxu0 0.0
    %99 = vmatprep.subr.mxu0 0.0
    %100 = vmatpush1.msra.mxu0 0.0
    %101 = vmatprep.subr.mxu0 0.0
    %102 = vmatpush1.msra.mxu0 0.0
    %103 = vmatprep.subr.mxu0 0.0
    %104 = vmatpush1.msra.mxu0 0.0
    %105 = vmatprep.subr.mxu0 0.0
    %106 = vmatpush1.msra.mxu0 0.0
    %107 = vmatprep.mubr.f32.mxu0 0.0
    %108 = vmatmul.mubr.f32.gmra.mrb[0].mxu0 %v41
    %v109 = vpop.f32.mrb[0].mxu0
    %v110 = vadd.f32 %v37, %v109
    %v111 = vpop.f32.mrb[0].mxu0
    %112 = vdwg.mxu0
    %v113 = vand.u32 2147483647, %v110
    %vm114 = vcmp.le.f32.partialorder %v113, 0.7853982
    %vm115 = vcmp.lt.s32.totalorder %v110, 0
    %v116 = vand.u32 %v110, 2139095040
    %v117 = vshrl.u32 %v116, 23
    %v118 = vsub.s32 %v117, 127
    %v119 = vand.u32 2147483647, %v110
    %v120 = vand.u32 %v119, 8388607
    %v121 = vor.u32 %v120, 8388608
    %v122 = vsub.s32 0, %v121
    %v123 = vadd.s32 %v118, 1
    %vm124 = vcmp.gt.s32.totalorder %v123, 0
    %v125 = vsel %vm124, %v123, 0
    %v126 = vshrl.u32 %v125, 5
    %v127 = vand.u32 %v125, 31
    %v128 = vsub.s32 32, %v127
    %v129 = vshrl.u32 683565275, %v128
    %v130 = vshll.u32 683565275, %v127
    %v131 = vshrl.u32 2475754826, %v128
    %v132 = vor.u32 %v130, %v131
    %v133 = vshll.u32 2475754826, %v127
    %v134 = vshrl.u32 2131351028, %v128
    %v135 = vor.u32 %v133, %v134
    %v136 = vshll.u32 2131351028, %v127
    %v137 = vshrl.u32 2102212464, %v128
    %v138 = vor.u32 %v136, %v137
    %v139 = vshll.u32 2102212464, %v127
    %v140 = vshrl.u32 920167782, %v128
    %v141 = vor.u32 %v139, %v140
    %v142 = vshll.u32 920167782, %v127
    %v143 = vshrl.u32 1326507024, %v128
    %v144 = vor.u32 %v142, %v143
    %vm145 = vcmp.lt.s32.totalorder %v126, 1
    %vm146 = vcmp.lt.s32.totalorder %v126, 2
    %vm147 = vcmp.lt.s32.totalorder %v126, 3
    %vm148 = vcmp.lt.s32.totalorder %v126, 4
    %v149 = vsel %vm145, %v129, %v132
    %v150 = vsel %vm148, %v138, 2102212464
    %v151 = vsel %vm147, %v135, %v150
    %v152 = vsel %vm146, %v149, %v151
    %v153 = vsel %vm145, %v132, %v135
    %v154 = vsel %vm148, %v141, 920167782
    %v155 = vsel %vm147, %v138, %v154
    %v156 = vsel %vm146, %v153, %v155
    %v157 = vsel %vm145, %v135, %v138
    %v158 = vsel %vm148, %v144, 1326507024
    %v159 = vsel %vm147, %v141, %v158
    %v160 = vsel %vm146, %v157, %v159
    %v161 = vshll.u32 %v121, 8
    %v162 = vmul.u32.u64.compose %v161, %v160
    %v163 = vextract.low.u32 %v162
    %v164 = vextract.high.u32 %v162
    %v165 = vmul.u32.u64.compose %v161, %v156
    %v166 = vextract.low.u32 %v165
    %v167 = vextract.high.u32 %v165
    %v168 = vmul.u32 %v161, %v152
    %v169 = vadd.s32 %v164, %v166
    %vm170 = vc.u32 %v164, %v166
    %v171 = vadd.s32 %v167, 1
    %v172 = vsel %vm170, %v171, %v167
    %v173 = vadd.s32 %v168, %v172
    %v174 = vadd.s32 %v173, 536870912
    %v175 = vshrl.u32 %v174, 30
    %v176 = vshll.u32 %v175, 30
    %v177 = vsub.s32 %v173, %v176
    %vm178 = vcmp.lt.s32.totalorder %v177, 0
    %v179 = vsub.s32 0, %v177
    %v180 = vsel %vm178, %v179, %v177
    %v181 = vclz %v180
    %v182 = vsub.s32 %v181, 2
    %vm183 = vcmp.gt.s32.totalorder 0, %v182
    %v184 = vsel %vm183, 0, %v182
    %v185 = vsub.s32 32, %v184
    %v186 = vshll.u32 %v177, %v184
    %v187 = vshrl.u32 %v169, %v185
    %v188 = vor.u32 %v186, %v187
    %v189 = vsub.s32 4294967266, %v184
    %v190 = vadd.s32 %v189, 127
    %v191 = vshll.u32 %v190, 23
    %v192 = vor.u32 4788187, %v191
    %v193 = vand.u32 2147483647, %v192
    %v195 = vcvt.s32.f32 %v188
    %v196 = vmul.f32 %v195, %v193
    %v197 = vxor.u32 %v196, 2147483648
    %v198 = vsel %vm115, %v197, %v196
    %v199 = vsub.s32 4, %v175
    %v200 = vsel %vm115, %v199, %v175
    %v201 = vsel %vm114, %v110, %v198
    %v202 = vsel %vm114, 0, %v200
    %v203 = vcosq.f32.pop %v201
    %v204 = vsinq.f32.pop %v201
    %vm205 = vweird.f32 %v110
    %v206 = vand.u32 %v202, 3
    %vm207 = vcmp.lt.s32.totalorder %v206, 2
    %vm208 = vcmp.eq.s32.totalorder %v206, 0
    %v209 = vxor.u32 %v204, 2147483648
    %v210 = vsel %vm208, %v203, %v209
    %vm211 = vcmp.eq.s32.totalorder %v206, 2
    %v212 = vxor.u32 %v203, 2147483648
    %v213 = vsel %vm211, %v212, %v204
    %v214 = vsel %vm207, %v210, %v213
    %v215 = vsel %vm205, nan, %v214
    %v216 = vld [vmem:[#allocation2] sm:$0xff]
    %v217 = vld [vmem:[%s3] sm:$0xff]
    %v218 = vld [vmem:[%s3 + $0x8] sm:$0xff]
    %v219 = vld [vmem:[%s3 + $0x10] sm:$0xff]
    %v220 = vld [vmem:[%s3 + $0x18] sm:$0xff]
    %v221 = vld [vmem:[%s3 + $0x20] sm:$0xff]
    %v222 = vld [vmem:[%s3 + $0x28] sm:$0xff]
    %v223 = vld [vmem:[%s3 + $0x30] sm:$0xff]
    %v224 = vld [vmem:[%s3 + $0x38] sm:$0xff]
    %v225 = vld [vmem:[%s3 + $0x40] sm:$0xff]
    %v226 = vld [vmem:[%s3 + $0x48] sm:$0xff]
    %v227 = vld [vmem:[%s3 + $0x50] sm:$0xff]
    %v228 = vld [vmem:[%s3 + $0x58] sm:$0xff]
    %v229 = vld [vmem:[%s3 + $0x60] sm:$0xff]
    %v230 = vld [vmem:[%s3 + $0x68] sm:$0xff]
    %v231 = vld [vmem:[%s3 + $0x70] sm:$0xff]
    %v232 = vld [vmem:[%s3 + $0x78] sm:$0xff]
    %233 = vmatprep.subr.mxu0 0.0
    %234 = vmatpush1.msra.mxu0 %v217
    %235 = vmatprep.subr.mxu0 0.0
    %236 = vmatpush1.msra.mxu0 %v218
    %237 = vmatprep.subr.mxu0 0.0
    %238 = vmatpush1.msra.mxu0 %v219
    %239 = vmatprep.subr.mxu0 0.0
    %240 = vmatpush1.msra.mxu0 %v220
    %241 = vmatprep.subr.mxu0 0.0
    %242 = vmatpush1.msra.mxu0 %v221
    %243 = vmatprep.subr.mxu0 0.0
    %244 = vmatpush1.msra.mxu0 %v222
    %245 = vmatprep.subr.mxu0 0.0
    %246 = vmatpush1.msra.mxu0 %v223
    %247 = vmatprep.subr.mxu0 0.0
    %248 = vmatpush1.msra.mxu0 %v224
    %249 = vmatprep.subr.mxu0 0.0
    %250 = vmatpush1.msra.mxu0 %v225
    %251 = vmatprep.subr.mxu0 0.0
    %252 = vmatpush1.msra.mxu0 %v226
    %253 = vmatprep.subr.mxu0 0.0
    %254 = vmatpush1.msra.mxu0 %v227
    %255 = vmatprep.subr.mxu0 0.0
    %256 = vmatpush1.msra.mxu0 %v228
    %257 = vmatprep.subr.mxu0 0.0
    %258 = vmatpush1.msra.mxu0 %v229
    %259 = vmatprep.subr.mxu0 0.0
    %260 = vmatpush1.msra.mxu0 %v230
    %261 = vmatprep.subr.mxu0 0.0
    %262 = vmatpush1.msra.mxu0 %v231
    %263 = vmatprep.subr.mxu0 0.0
    %264 = vmatpush1.msra.mxu0 %v232
    %265 = vmatprep.subr.mxu0 0.0
    %266 = vmatpush1.msra.mxu0 0.0
    %267 = vmatprep.subr.mxu0 0.0
    %268 = vmatpush1.msra.mxu0 0.0
    %269 = vmatprep.subr.mxu0 0.0
    %270 = vmatpush1.msra.mxu0 0.0
    %271 = vmatprep.subr.mxu0 0.0
    %272 = vmatpush1.msra.mxu0 0.0
    %273 = vmatprep.subr.mxu0 0.0
    %274 = vmatpush1.msra.mxu0 0.0
    %275 = vmatprep.subr.mxu0 0.0
    %276 = vmatpush1.msra.mxu0 0.0
    %277 = vmatprep.subr.mxu0 0.0
    %278 = vmatpush1.msra.mxu0 0.0
    %279 = vmatprep.subr.mxu0 0.0
    %280 = vmatpush1.msra.mxu0 0.0
    %281 = vmatprep.subr.mxu0 0.0
    %282 = vmatpush1.msra.mxu0 0.0
    %283 = vmatprep.subr.mxu0 0.0
    %284 = vmatpush1.msra.mxu0 0.0
    %285 = vmatprep.subr.mxu0 0.0
    %286 = vmatpush1.msra.mxu0 0.0
    %287 = vmatprep.subr.mxu0 0.0
    %288 = vmatpush1.msra.mxu0 0.0
    %289 = vmatprep.subr.mxu0 0.0
    %290 = vmatpush1.msra.mxu0 0.0
    %291 = vmatprep.subr.mxu0 0.0
    %292 = vmatpush1.msra.mxu0 0.0
    %293 = vmatprep.subr.mxu0 0.0
    %294 = vmatpush1.msra.mxu0 0.0
    %295 = vmatprep.subr.mxu0 0.0
    %296 = vmatpush1.msra.mxu0 0.0
    %297 = vmatprep.mubr.f32.mxu0 0.0
    %298 = vmatmul.mubr.f32.gmra.mrb[0].mxu0 %v215
    %v299 = vpop.f32.mrb[0].mxu0
    %v300 = vadd.f32 0.0, %v299
    %v301 = vpop.f32.mrb[0].mxu0
    %302 = vdwg.mxu0
    %v303 = vadd.f32 %v216, %v300
    %vm304 = vcmask 64512
    %305 = vst.msk [vmem:[#allocation2] sm:$0xff] %vm304, %v303
    // Predicated region
    $region26: #{tpu_custom_call.1} parent=1 // pred_check
      %p306 = pneg %p21
    $region27: #{tpu_custom_call.1} parent=1 // pred_check_branch
      %308 = sbr.rel (%p306) target = $region29
    $region28: #{tpu_custom_call.1} parent=1 // pred_region
      %v309 = vld [vmem:[#allocation2] sm:$0xff]
      %v310 = vld [vmem:[%s4] sm:$0x1]
      %v312 = vlaneseq
      %v313 = vshrl.u32 %v312, 7
      %v314 = vsub.s32 0, %v313
      %v315 = vrot.slane %v310, %v314
      %v317 = vadd.f32 %v309, %v315
      %v318 = vmax.f32 %v317, -1.0
      %v319 = vmin.f32 %v318, 1.0
      %v320 = vmax.f32 %v317, 0.0
      %v321 = vand.u32 2147483647, %v317
      %v322 = vsub.f32 0.0, %v321
      %v323 = vmul.f32 %v322, 1.442695
      %v324 = vpow.pop %v323
      %v325 = vadd.f32 %v324, 1.0
      %v326 = vlog2.pop %v325
      %v327 = vmul.f32 %v326, 0.6931472
      %v328 = vmul.f32 -0.5, %v324
      %v329 = vadd.f32 %v328, 1.0
      %v330 = vmul.f32 %v329, %v324
      %v331 = vand.u32 2147483647, %v324
      %vm332 = vcmp.lt.f32.partialorder %v331, 0.0004427343
      %v333 = vsel %vm332, %v330, %v327
      %v334 = vadd.f32 %v320, %v333
      %336 = vrot.lane.b32.xlu0 %v334, 127
      %v337 = vpop.permute.xlu0 %336
      %v339 = vsub.f32 %v319, %v337
      %v340 = vmax.f32 %v339, -1.0
      %v341 = vmin.f32 %v340, 1.0
      %342 = vrot.lane.b32.xlu0 %v334, 126
      %v343 = vpop.permute.xlu0 %342
      %v345 = vadd.f32 %v319, %v343
      %v346 = vmax.f32 %v345, -1.0
      %v347 = vmin.f32 %v346, 1.0
      %349 = vrot.lane.b32.xlu0 %v319, 1
      %v350 = vpop.permute.xlu0 %349
      %353 = vrot.lane.b32.xlu0 %v347, 2
      %v354 = vpop.permute.xlu0 %353
      %vm356 = vcmask 7168
      %v357 = vsel %vm356, %v341, %v350
      %vm358 = vcmask 15360
      %v359 = vsel %vm358, %v357, %v354
      %vm360 = vcmask 23552
      %v361 = vsel %vm360, %v359, 0.0
      %362 = vst.msk [vmem:[#allocation3] sm:$0xff] %vm304, %v361
    $region29: #{tpu_custom_call.1} parent=1 // pred_fallthru
      _
    // Predicated region
    $region30: #{tpu_custom_call.1} parent=1 // pred_check
      _
    $region31: #{tpu_custom_call.1} parent=1 // pred_check_branch
      %364 = sbr.rel (0) target = $region33
    $region32: #{tpu_custom_call.1} parent=1 // pred_region
      %s366 = ssub.s32 128, 128
      %367 = vsyncadd [#allocation4], %s366
      %s369 = sshll.u32 [#allocation3], 4
      %s370 = int_to_ptr.vmem [resolvable:$true] %s369
      %372 = dma.vmem_to_hbm [thread:$0]  %s370, 128, %s5, [#allocation4]
    $region33: #{tpu_custom_call.1} parent=1 // pred_fallthru
      _
    // Predicated region
    $region34: #{tpu_custom_call.1} parent=1 // pred_check
      _
    $region35: #{tpu_custom_call.1} parent=1 // pred_check_branch
      %374 = sbr.rel (0) target = $region37
    $region36: #{tpu_custom_call.1} parent=1 // pred_region
      %375 = dma.done [#allocation4], 128
    $region37: #{tpu_custom_call.1} parent=1 // pred_fallthru
      _
    %376 = vsyncpa [#allocation4], 1

// kernel: tpu_custom_call.1
$region0: #{tpu_custom_call.1}
  #allocation0 [shape = 'u32[]', space=smem, size = 0x4, offset = 0x4, fixed_abs, tag = 'smem constant byte address 0x4 - core index']
  #allocation1 [shape = 'u32[144,128]{1,0:T(1,128)}', space=vmem, size = 0x12000, scoped, tag = 'internal scratch']
  #allocation2 [shape = 'f32[8,8]{1,0:T(8,128)}', space=vmem, size = 0x1000, scoped, tag = 'scratch operand']
  %s0 = inlined_call_operand.vmem [shape: f32[8,32], index: 0, kind: input, shape index: {}]
  %s1 = inlined_call_operand.vmem [shape: f32[32,128], index: 1, kind: input, shape index: {}]
  %s2 = inlined_call_operand.vmem [shape: f32[1,128], index: 2, kind: input, shape index: {}]
  %s3 = inlined_call_operand.vmem [shape: f32[128,8], index: 3, kind: input, shape index: {}]
  %s4 = inlined_call_operand.vmem [shape: f32[1,8], index: 4, kind: input, shape index: {}]
  %s5 = inlined_call_operand.hbm [shape: f32[8,8], index: 5, kind: output, shape index: {}]
  %s6 = sld [smem:[#allocation0]]
  $region38: #{tpu_custom_call.1} parent=0
    _
  %s8 = ssub.s32 1, %s6
  %s9 = scalar_select 0, %s8, %s6
  $region1: #{tpu_custom_call.1} parent=0
    #allocation3 [shape = 'u8[4096]{0}', space=vmem, size = 0x1000, scoped, tag = 'output window, operand 0, single buffered']
    #allocation4 [shape = 's32[1]{0}', space=sflag, size = 0x4, scoped, tag = 'scoped memory for tpu_custom_call.1']
    %10 = vsyncpa [#allocation4], 0
    // Predicated region
    $region2: #{tpu_custom_call.1} parent=1 // pred_check
      _
    $region3: #{tpu_custom_call.1} parent=1 // pred_check_branch
      %12 = sbr.rel (0) target = $region5
    $region4: #{tpu_custom_call.1} parent=1 // pred_region
      _
    $region5: #{tpu_custom_call.1} parent=1 // pred_fallthru
      _
    // Predicated region
    $region6: #{tpu_custom_call.1} parent=1 // pred_check
      _
    $region7: #{tpu_custom_call.1} parent=1 // pred_check_branch
      %14 = sbr.rel (0) target = $region9
    $region8: #{tpu_custom_call.1} parent=1 // pred_region
      _
    $region9: #{tpu_custom_call.1} parent=1 // pred_fallthru
      _
    // Predicated region
    $region10: #{tpu_custom_call.1} parent=1 // pred_check
      _
    $region11: #{tpu_custom_call.1} parent=1 // pred_check_branch
      %16 = sbr.rel (0) target = $region13
    $region12: #{tpu_custom_call.1} parent=1 // pred_region
      _
    $region13: #{tpu_custom_call.1} parent=1 // pred_fallthru
      _
    // Predicated region
    $region14: #{tpu_custom_call.1} parent=1 // pred_check
      _
    $region15: #{tpu_custom_call.1} parent=1 // pred_check_branch
      %18 = sbr.rel (0) target = $region17
    $region16: #{tpu_custom_call.1} parent=1 // pred_region
      _
    $region17: #{tpu_custom_call.1} parent=1 // pred_fallthru
      _
    // Predicated region
    $region18: #{tpu_custom_call.1} parent=1 // pred_check
      _
    $region19: #{tpu_custom_call.1} parent=1 // pred_check_branch
      %20 = sbr.rel (0) target = $region21
    $region20: #{tpu_custom_call.1} parent=1 // pred_region
      _
    $region21: #{tpu_custom_call.1} parent=1 // pred_fallthru
      _
    %p21 = scmp.eq.s32.totalorder 0, 0
    // Predicated region
    $region22: #{tpu_custom_call.1} parent=1 // pred_check
      %p22 = pneg %p21
    $region23: #{tpu_custom_call.1} parent=1 // pred_check_branch
      %24 = sbr.rel (%p22) target = $region25
    $region24: #{tpu_custom_call.1} parent=1 // pred_region
      %vm25 = vcmask 64512
      %26 = vst.msk [vmem:[#allocation2] sm:$0xff] %vm25, 0.0
    $region25: #{tpu_custom_call.1} parent=1 // pred_fallthru
      _
    %v27 = vld [vmem:[%s0] sm:$0xff]
    %v28 = vld [vmem:[%s1] sm:$0xff]
    %v29 = vld [vmem:[%s1 + $0x8] sm:$0xff]
    %v30 = vld [vmem:[%s1 + $0x10] sm:$0xff]
    %v31 = vld [vmem:[%s1 + $0x18] sm:$0xff]
    %v32 = vld [vmem:[%s2] sm:$0x1]
    %v34 = vlaneseq
    %v35 = vshrl.u32 %v34, 7
    %v36 = vsub.s32 0, %v35
    %v37 = vrot.slane %v32, %v36
    %vm39 = vcmask 261120
    %v41 = vsel %vm39, %v27, 0
    %43 = vmatprep.subr.mxu0 0.0
    %44 = vmatpush1.msra.mxu0 %v28
    %45 = vmatprep.subr.mxu0 0.0
    %46 = vmatpush1.msra.mxu0 %v29
    %47 = vmatprep.subr.mxu0 0.0
    %48 = vmatpush1.msra.mxu0 %v30
    %49 = vmatprep.subr.mxu0 0.0
    %50 = vmatpush1.msra.mxu0 %v31
    %51 = vmatprep.subr.mxu0 0.0
    %52 = vmatpush1.msra.mxu0 0.0
    %53 = vmatprep.subr.mxu0 0.0
    %54 = vmatpush1.msra.mxu0 0.0
    %55 = vmatprep.subr.mxu0 0.0
    %56 = vmatpush1.msra.mxu0 0.0
    %57 = vmatprep.subr.mxu0 0.0
    %58 = vmatpush1.msra.mxu0 0.0
    %59 = vmatprep.subr.mxu0 0.0
    %60 = vmatpush1.msra.mxu0 0.0
    %61 = vmatprep.subr.mxu0 0.0
    %62 = vmatpush1.msra.mxu0 0.0
    %63 = vmatprep.subr.mxu0 0.0
    %64 = vmatpush1.msra.mxu0 0.0
    %65 = vmatprep.subr.mxu0 0.0
    %66 = vmatpush1.msra.mxu0 0.0
    %67 = vmatprep.subr.mxu0 0.0
    %68 = vmatpush1.msra.mxu0 0.0
    %69 = vmatprep.subr.mxu0 0.0
    %70 = vmatpush1.msra.mxu0 0.0
    %71 = vmatprep.subr.mxu0 0.0
    %72 = vmatpush1.msra.mxu0 0.0
    %73 = vmatprep.subr.mxu0 0.0
    %74 = vmatpush1.msra.mxu0 0.0
    %75 = vmatprep.subr.mxu0 0.0
    %76 = vmatpush1.msra.mxu0 0.0
    %77 = vmatprep.subr.mxu0 0.0
    %78 = vmatpush1.msra.mxu0 0.0
    %79 = vmatprep.subr.mxu0 0.0
    %80 = vmatpush1.msra.mxu0 0.0
    %81 = vmatprep.subr.mxu0 0.0
    %82 = vmatpush1.msra.mxu0 0.0
    %83 = vmatprep.subr.mxu0 0.0
    %84 = vmatpush1.msra.mxu0 0.0
    %85 = vmatprep.subr.mxu0 0.0
    %86 = vmatpush1.msra.mxu0 0.0
    %87 = vmatprep.subr.mxu0 0.0
    %88 = vmatpush1.msra.mxu0 0.0
    %89 = vmatprep.subr.mxu0 0.0
    %90 = vmatpush1.msra.mxu0 0.0
    %91 = vmatprep.subr.mxu0 0.0
    %92 = vmatpush1.msra.mxu0 0.0
    %93 = vmatprep.subr.mxu0 0.0
    %94 = vmatpush1.msra.mxu0 0.0
    %95 = vmatprep.subr.mxu0 0.0
    %96 = vmatpush1.msra.mxu0 0.0
    %97 = vmatprep.subr.mxu0 0.0
    %98 = vmatpush1.msra.mxu0 0.0
    %99 = vmatprep.subr.mxu0 0.0
    %100 = vmatpush1.msra.mxu0 0.0
    %101 = vmatprep.subr.mxu0 0.0
    %102 = vmatpush1.msra.mxu0 0.0
    %103 = vmatprep.subr.mxu0 0.0
    %104 = vmatpush1.msra.mxu0 0.0
    %105 = vmatprep.subr.mxu0 0.0
    %106 = vmatpush1.msra.mxu0 0.0
    %107 = vmatprep.mubr.f32.mxu0 0.0
    %108 = vmatmul.mubr.f32.gmra.mrb[0].mxu0 %v41
    %v109 = vpop.f32.mrb[0].mxu0
    %v110 = vadd.f32 %v37, %v109
    %v111 = vpop.f32.mrb[0].mxu0
    %112 = vdwg.mxu0
    %v113 = vand.u32 2147483647, %v110
    %vm114 = vcmp.le.f32.partialorder %v113, 0.7853982
    %vm115 = vcmp.lt.s32.totalorder %v110, 0
    %v116 = vand.u32 %v110, 2139095040
    %v117 = vshrl.u32 %v116, 23
    %v118 = vsub.s32 %v117, 127
    %v119 = vand.u32 2147483647, %v110
    %v120 = vand.u32 %v119, 8388607
    %v121 = vor.u32 %v120, 8388608
    %v122 = vsub.s32 0, %v121
    %v123 = vadd.s32 %v118, 1
    %vm124 = vcmp.gt.s32.totalorder %v123, 0
    %v125 = vsel %vm124, %v123, 0
    %v126 = vshrl.u32 %v125, 5
    %v127 = vand.u32 %v125, 31
    %v128 = vsub.s32 32, %v127
    %v129 = vshrl.u32 683565275, %v128
    %v130 = vshll.u32 683565275, %v127
    %v131 = vshrl.u32 2475754826, %v128
    %v132 = vor.u32 %v130, %v131
    %v133 = vshll.u32 2475754826, %v127
    %v134 = vshrl.u32 2131351028, %v128
    %v135 = vor.u32 %v133, %v134
    %v136 = vshll.u32 2131351028, %v127
    %v137 = vshrl.u32 2102212464, %v128
    %v138 = vor.u32 %v136, %v137
    %v139 = vshll.u32 2102212464, %v127
    %v140 = vshrl.u32 920167782, %v128
    %v141 = vor.u32 %v139, %v140
    %v142 = vshll.u32 920167782, %v127
    %v143 = vshrl.u32 1326507024, %v128
    %v144 = vor.u32 %v142, %v143
    %vm145 = vcmp.lt.s32.totalorder %v126, 1
    %vm146 = vcmp.lt.s32.totalorder %v126, 2
    %vm147 = vcmp.lt.s32.totalorder %v126, 3
    %vm148 = vcmp.lt.s32.totalorder %v126, 4
    %v149 = vsel %vm145, %v129, %v132
    %v150 = vsel %vm148, %v138, 2102212464
    %v151 = vsel %vm147, %v135, %v150
    %v152 = vsel %vm146, %v149, %v151
    %v153 = vsel %vm145, %v132, %v135
    %v154 = vsel %vm148, %v141, 920167782
    %v155 = vsel %vm147, %v138, %v154
    %v156 = vsel %vm146, %v153, %v155
    %v157 = vsel %vm145, %v135, %v138
    %v158 = vsel %vm148, %v144, 1326507024
    %v159 = vsel %vm147, %v141, %v158
    %v160 = vsel %vm146, %v157, %v159
    %v161 = vshll.u32 %v121, 8
    %v162 = vmul.u32.u64.compose %v161, %v160
    %v163 = vextract.low.u32 %v162
    %v164 = vextract.high.u32 %v162
    %v165 = vmul.u32.u64.compose %v161, %v156
    %v166 = vextract.low.u32 %v165
    %v167 = vextract.high.u32 %v165
    %v168 = vmul.u32 %v161, %v152
    %v169 = vadd.s32 %v164, %v166
    %vm170 = vc.u32 %v164, %v166
    %v171 = vadd.s32 %v167, 1
    %v172 = vsel %vm170, %v171, %v167
    %v173 = vadd.s32 %v168, %v172
    %v174 = vadd.s32 %v173, 536870912
    %v175 = vshrl.u32 %v174, 30
    %v176 = vshll.u32 %v175, 30
    %v177 = vsub.s32 %v173, %v176
    %vm178 = vcmp.lt.s32.totalorder %v177, 0
    %v179 = vsub.s32 0, %v177
    %v180 = vsel %vm178, %v179, %v177
    %v181 = vclz %v180
    %v182 = vsub.s32 %v181, 2
    %vm183 = vcmp.gt.s32.totalorder 0, %v182
    %v184 = vsel %vm183, 0, %v182
    %v185 = vsub.s32 32, %v184
    %v186 = vshll.u32 %v177, %v184
    %v187 = vshrl.u32 %v169, %v185
    %v188 = vor.u32 %v186, %v187
    %v189 = vsub.s32 4294967266, %v184
    %v190 = vadd.s32 %v189, 127
    %v191 = vshll.u32 %v190, 23
    %v192 = vor.u32 4788187, %v191
    %v193 = vand.u32 2147483647, %v192
    %v195 = vcvt.s32.f32 %v188
    %v196 = vmul.f32 %v195, %v193
    %v197 = vxor.u32 %v196, 2147483648
    %v198 = vsel %vm115, %v197, %v196
    %v199 = vsub.s32 4, %v175
    %v200 = vsel %vm115, %v199, %v175
    %v201 = vsel %vm114, %v110, %v198
    %v202 = vsel %vm114, 0, %v200
    %v203 = vcosq.f32.pop %v201
    %v204 = vsinq.f32.pop %v201
    %vm205 = vweird.f32 %v110
    %v206 = vand.u32 %v202, 3
    %vm207 = vcmp.lt.s32.totalorder %v206, 2
    %vm208 = vcmp.eq.s32.totalorder %v206, 0
    %v209 = vxor.u32 %v204, 2147483648
    %v210 = vsel %vm208, %v203, %v209
    %vm211 = vcmp.eq.s32.totalorder %v206, 2
    %v212 = vxor.u32 %v203, 2147483648
    %v213 = vsel %vm211, %v212, %v204
    %v214 = vsel %vm207, %v210, %v213
    %v215 = vsel %vm205, nan, %v214
    %v216 = vld [vmem:[#allocation2] sm:$0xff]
    %v217 = vld [vmem:[%s3] sm:$0xff]
    %v218 = vld [vmem:[%s3 + $0x8] sm:$0xff]
    %v219 = vld [vmem:[%s3 + $0x10] sm:$0xff]
    %v220 = vld [vmem:[%s3 + $0x18] sm:$0xff]
    %v221 = vld [vmem:[%s3 + $0x20] sm:$0xff]
    %v222 = vld [vmem:[%s3 + $0x28] sm:$0xff]
    %v223 = vld [vmem:[%s3 + $0x30] sm:$0xff]
    %v224 = vld [vmem:[%s3 + $0x38] sm:$0xff]
    %v225 = vld [vmem:[%s3 + $0x40] sm:$0xff]
    %v226 = vld [vmem:[%s3 + $0x48] sm:$0xff]
    %v227 = vld [vmem:[%s3 + $0x50] sm:$0xff]
    %v228 = vld [vmem:[%s3 + $0x58] sm:$0xff]
    %v229 = vld [vmem:[%s3 + $0x60] sm:$0xff]
    %v230 = vld [vmem:[%s3 + $0x68] sm:$0xff]
    %v231 = vld [vmem:[%s3 + $0x70] sm:$0xff]
    %v232 = vld [vmem:[%s3 + $0x78] sm:$0xff]
    %233 = vmatprep.subr.mxu0 0.0
    %234 = vmatpush1.msra.mxu0 %v217
    %235 = vmatprep.subr.mxu0 0.0
    %236 = vmatpush1.msra.mxu0 %v218
    %237 = vmatprep.subr.mxu0 0.0
    %238 = vmatpush1.msra.mxu0 %v219
    %239 = vmatprep.subr.mxu0 0.0
    %240 = vmatpush1.msra.mxu0 %v220
    %241 = vmatprep.subr.mxu0 0.0
    %242 = vmatpush1.msra.mxu0 %v221
    %243 = vmatprep.subr.mxu0 0.0
    %244 = vmatpush1.msra.mxu0 %v222
    %245 = vmatprep.subr.mxu0 0.0
    %246 = vmatpush1.msra.mxu0 %v223
    %247 = vmatprep.subr.mxu0 0.0
    %248 = vmatpush1.msra.mxu0 %v224
    %249 = vmatprep.subr.mxu0 0.0
    %250 = vmatpush1.msra.mxu0 %v225
    %251 = vmatprep.subr.mxu0 0.0
    %252 = vmatpush1.msra.mxu0 %v226
    %253 = vmatprep.subr.mxu0 0.0
    %254 = vmatpush1.msra.mxu0 %v227
    %255 = vmatprep.subr.mxu0 0.0
    %256 = vmatpush1.msra.mxu0 %v228
    %257 = vmatprep.subr.mxu0 0.0
    %258 = vmatpush1.msra.mxu0 %v229
    %259 = vmatprep.subr.mxu0 0.0
    %260 = vmatpush1.msra.mxu0 %v230
    %261 = vmatprep.subr.mxu0 0.0
    %262 = vmatpush1.msra.mxu0 %v231
    %263 = vmatprep.subr.mxu0 0.0
    %264 = vmatpush1.msra.mxu0 %v232
    %265 = vmatprep.subr.mxu0 0.0
    %266 = vmatpush1.msra.mxu0 0.0
    %267 = vmatprep.subr.mxu0 0.0
    %268 = vmatpush1.msra.mxu0 0.0
    %269 = vmatprep.subr.mxu0 0.0
    %270 = vmatpush1.msra.mxu0 0.0
    %271 = vmatprep.subr.mxu0 0.0
    %272 = vmatpush1.msra.mxu0 0.0
    %273 = vmatprep.subr.mxu0 0.0
    %274 = vmatpush1.msra.mxu0 0.0
    %275 = vmatprep.subr.mxu0 0.0
    %276 = vmatpush1.msra.mxu0 0.0
    %277 = vmatprep.subr.mxu0 0.0
    %278 = vmatpush1.msra.mxu0 0.0
    %279 = vmatprep.subr.mxu0 0.0
    %280 = vmatpush1.msra.mxu0 0.0
    %281 = vmatprep.subr.mxu0 0.0
    %282 = vmatpush1.msra.mxu0 0.0
    %283 = vmatprep.subr.mxu0 0.0
    %284 = vmatpush1.msra.mxu0 0.0
    %285 = vmatprep.subr.mxu0 0.0
    %286 = vmatpush1.msra.mxu0 0.0
    %287 = vmatprep.subr.mxu0 0.0
    %288 = vmatpush1.msra.mxu0 0.0
    %289 = vmatprep.subr.mxu0 0.0
    %290 = vmatpush1.msra.mxu0 0.0
    %291 = vmatprep.subr.mxu0 0.0
    %292 = vmatpush1.msra.mxu0 0.0
    %293 = vmatprep.subr.mxu0 0.0
    %294 = vmatpush1.msra.mxu0 0.0
    %295 = vmatprep.subr.mxu0 0.0
    %296 = vmatpush1.msra.mxu0 0.0
    %297 = vmatprep.mubr.f32.mxu0 0.0
    %298 = vmatmul.mubr.f32.gmra.mrb[0].mxu0 %v215
    %v299 = vpop.f32.mrb[0].mxu0
    %v300 = vadd.f32 0.0, %v299
    %v301 = vpop.f32.mrb[0].mxu0
    %302 = vdwg.mxu0
    %v303 = vadd.f32 %v216, %v300
    %vm304 = vcmask 64512
    %305 = vst.msk [vmem:[#allocation2] sm:$0xff] %vm304, %v303
    // Predicated region
    $region26: #{tpu_custom_call.1} parent=1 // pred_check
      %p306 = pneg %p21
    $region27: #{tpu_custom_call.1} parent=1 // pred_check_branch
      %308 = sbr.rel (%p306) target = $region29
    $region28: #{tpu_custom_call.1} parent=1 // pred_region
      %v309 = vld [vmem:[#allocation2] sm:$0xff]
      %v310 = vld [vmem:[%s4] sm:$0x1]
      %v312 = vlaneseq
      %v313 = vshrl.u32 %v312, 7
      %v314 = vsub.s32 0, %v313
      %v315 = vrot.slane %v310, %v314
      %v317 = vadd.f32 %v309, %v315
      %v318 = vmax.f32 %v317, -1.0
      %v319 = vmin.f32 %v318, 1.0
      %v320 = vmax.f32 %v317, 0.0
      %v321 = vand.u32 2147483647, %v317
      %v322 = vsub.f32 0.0, %v321
      %v323 = vmul.f32 %v322, 1.442695
      %v324 = vpow.pop %v323
      %v325 = vadd.f32 %v324, 1.0
      %v326 = vlog2.pop %v325
      %v327 = vmul.f32 %v326, 0.6931472
      %v328 = vmul.f32 -0.5, %v324
      %v329 = vadd.f32 %v328, 1.0
      %v330 = vmul.f32 %v329, %v324
      %v331 = vand.u32 2147483647, %v324
      %vm332 = vcmp.lt.f32.partialorder %v331, 0.0004427343
      %v333 = vsel %vm332, %v330, %v327
      %v334 = vadd.f32 %v320, %v333
      %336 = vrot.lane.b32.xlu0 %v334, 127
      %v337 = vpop.permute.xlu0 %336
      %v339 = vsub.f32 %v319, %v337
      %v340 = vmax.f32 %v339, -1.0
      %v341 = vmin.f32 %v340, 1.0
      %342 = vrot.lane.b32.xlu0 %v334, 126
      %v343 = vpop.permute.xlu0 %342
      %v345 = vadd.f32 %v319, %v343
      %v346 = vmax.f32 %v345, -1.0
      %v347 = vmin.f32 %v346, 1.0
      %349 = vrot.lane.b32.xlu0 %v319, 1
      %v350 = vpop.permute.xlu0 %349
      %353 = vrot.lane.b32.xlu0 %v347, 2
      %v354 = vpop.permute.xlu0 %353
      %vm356 = vcmask 7168
      %v357 = vsel %vm356, %v341, %v350
      %vm358 = vcmask 15360
      %v359 = vsel %vm358, %v357, %v354
      %vm360 = vcmask 23552
      %v361 = vsel %vm360, %v359, 0.0
      %362 = vst.msk [vmem:[#allocation3] sm:$0xff] %vm304, %v361
    $region29: #{tpu_custom_call.1} parent=1 // pred_fallthru
      _
    // Predicated region
    $region30: #{tpu_custom_call.1} parent=1 // pred_check
      _
    $region31: #{tpu_custom_call.1} parent=1 // pred_check_branch
      %364 = sbr.rel (0) target = $region33
    $region32: #{tpu_custom_call.1} parent=1 // pred_region
      %s366 = ssub.s32 128, 128
      %367 = vsyncadd [#allocation4], %s366
      %s369 = sshll.u32 [#allocation3], 4
      %s370 = int_to_ptr.vmem [resolvable:$true] %s369
      %372 = dma.vmem_to_hbm [thread:$0]  %s370, 128, %s5, [#allocation4]
    $region33: #{tpu_custom_call.1} parent=1 // pred_fallthru
      _
    // Predicated region
    $region34: #{tpu_custom_call.1} parent=1 // pred_check
      _
    $region35: #{tpu_custom_call.1} parent=1 // pred_check_branch
      %374 = sbr.rel (0) target = $region37
    $region36: #{tpu_custom_call.1} parent=1 // pred_region
      %375 = dma.done [#allocation4], 128
    $region37: #{tpu_custom_call.1} parent=1 // pred_fallthru
      _
    %376 = vsyncpa [#allocation4], 1

</llo_original>
